<compile_context>
chip_gen: v7x
topology: tpu7x:2x2x1
jax: 0.10.0
libtpu: 0.0.40
codegen_flags: <defaults>
</compile_context>

<pallas_src>
import functools

import jax
import jax.numpy as jnp
from jax import lax
from jax.experimental import pallas as pl
from jax.experimental.pallas import tpu as pltpu


def _conv_pool_kernel(x_ref, w_ref, b_ref, pg_ref, *, H, W):
    """Packed phi/g 1x1 conv + fused 2x2 max-pool for one batch element.

    x_ref : (1, C, N)   f32,  N = H*W (NCHW flattened; spatial on lanes)
    w_ref : (C, C2)     bf16, C2 = 2*IC packed as [phi | g] along columns
    b_ref : (1, C2)     f32
    pg_ref: (1, C2, Ns) bf16, Ns = (H//2)*(W//2); rows [0:IC]=phi, [IC:]=g
    """
    Hs, Ws = H // 2, W // 2
    C2 = w_ref.shape[1]
    x = x_ref[0].astype(jnp.bfloat16)                                   # (C, N)

    # 1x1 conv on the MXU (bf16 inputs, f32 accumulation): (N, C2) = x^T @ w.
    pg = lax.dot_general(x, w_ref[...], (((0,), (0,)), ((), ())),
                         preferred_element_type=jnp.float32)
    pg = pg + b_ref[...]                                                # bias pre-pool

    # 2x2 max-pool over the (H, W) view of N (row-major); the lane dim (C2) is never
    # reshaped, so these are cheap leading-dim regroupings.
    pg = pg.reshape(Hs, 2 * W, C2)
    pg = jnp.maximum(pg[:, :W, :], pg[:, W:, :])      # pool over h -> (Hs, W, C2)
    pg = pg.reshape(Hs, Ws, 2, C2)
    pg = jnp.max(pg, axis=2)                          # pool over w -> (Hs, Ws, C2)
    pg = pg.reshape(Hs * Ws, C2)

    # Store as (C2, Ns) bf16: kernel 2 splits phi/g along sublanes (free) and its
    # attention matmuls consume bf16 directly.
    pg_ref[0] = jnp.transpose(pg).astype(jnp.bfloat16)


def _attn_kernel(x_ref, pg_ref, wt_ref, bt_ref, ww_ref, bw_ref, z_ref, *, IC):
    """theta conv + attention + softmax + W conv (BN folded) + residual for one
    (batch, query-tile) block.  Channels on sublanes, queries on lanes.

    x_ref : (1, C, tq)   f32
    pg_ref: (1, C2, Ns)  bf16 packed [phi ; g] along sublanes (resident per batch)
    wt_ref: (IC, C) bf16 ; bt_ref: (IC, 1) f32
    ww_ref: (C, IC) bf16 (BN folded) ; bw_ref: (C, 1) f32 (BN folded)
    z_ref : (1, C, tq)   f32
    """
    x = x_ref[0]                                                        # (C, tq) f32
    xb = x.astype(jnp.bfloat16)

    # theta 1x1 conv (bf16 MXU, f32 acc), recomputed per tile (x already resident).
    theta = jnp.dot(wt_ref[...], xb,
                    preferred_element_type=jnp.float32) + bt_ref[...]  # (IC, tq)

    pg = pg_ref[0]                                                      # (C2, Ns) bf16
    phi = pg[:IC, :]                                                    # (IC, Ns) sublane slice
    g = pg[IC:, :]                                                      # (IC, Ns)

    # scores f[q, s] = sum_ic theta[ic, q] * phi[ic, s]  -> (tq, Ns)
    f = lax.dot_general(theta.astype(jnp.bfloat16), phi,
                        (((0,), (0,)), ((), ())),
                        preferred_element_type=jnp.float32)

    # Softmax over Ns in f32; normalization deferred until after the PV matmul.
    m = jnp.max(f, axis=-1, keepdims=True)
    p = jnp.exp(f - m)                                                  # (tq, Ns) unnormalized
    s = jnp.sum(p, axis=-1, keepdims=True)                              # (tq, 1)

    # y[q, ic] = sum_s p[q, s] * g[ic, s]  -> (tq, IC)
    y = lax.dot_general(p.astype(jnp.bfloat16), g,
                        (((1,), (1,)), ((), ())),
                        preferred_element_type=jnp.float32)
    y = y * pl.reciprocal(s, approx=True)                               # post-PV normalize

    # W 1x1 conv (+ folded BN affine): wy[c, q] = sum_ic ww[c, ic] * y[q, ic]
    wy = lax.dot_general(ww_ref[...], y.astype(jnp.bfloat16),
                         (((1,), (1,)), ((), ())),
                         preferred_element_type=jnp.float32)            # (C, tq)
    z_ref[0] = wy + bw_ref[...] + x


def _pick_tq(N, tq_pref):
    """Largest divisor of N that is a multiple of 128 (lane-dim block constraint) and
    <= max(tq_pref, 128); fall back to the full N (always a legal block)."""
    best = None
    cap = max(int(tq_pref), 128)
    t = 128
    while t <= min(N, cap):
        if N % t == 0:
            best = t
        t += 128
    return best if best is not None else N


def _vmem_limit_bytes(need_bytes):
    cap = 64 * 1024 * 1024          # safe on every TPU generation (v7x: 64 MiB per TC)
    try:
        cap = int(0.75 * int(pltpu.get_tpu_info().vmem_capacity_bytes))
    except Exception:
        pass
    return int(min(max(2 * int(need_bytes), 32 * 1024 * 1024),
                   max(cap, 16 * 1024 * 1024)))


def non_local_block_nd(x, params, *, tq=256):
    """x: (B, C, H, W) float32 NCHW.  Returns (B, C, H, W)."""
    B, C, H, W = x.shape
    assert H % 2 == 0 and W % 2 == 0, "sub_sample 2x2 max-pool needs even H, W"
    IC = params["w_theta"].shape[1]
    C2 = 2 * IC
    N = H * W
    Hs, Ws = H // 2, W // 2
    Ns = Hs * Ws

    tq = _pick_tq(N, tq)
    nq = N // tq

    # NCHW -> (B, C, N): a free reshape (no HBM transpose pass in either direction).
    x_flat = x.reshape(B, C, N).astype(jnp.float32)

    # Pack phi/g 1x1-conv weights into a single (C, 2*IC) matmul; bf16 MXU inputs.
    w_pg = jnp.concatenate([params["w_phi"], params["w_g"]], axis=1).astype(jnp.bfloat16)
    b_pg = jnp.concatenate([params["b_phi"], params["b_g"]], axis=1)          # (1, C2) f32

    # theta weights in (IC, C) so theta = w @ x is a standard MXU matmul.
    w_th = jnp.transpose(params["w_theta"]).astype(jnp.bfloat16)              # (IC, C)
    b_th = jnp.transpose(params["b_theta"])                                   # (IC, 1) f32

    # Fold BatchNorm (inference affine) into the W 1x1 conv; bf16 weights.
    eps = 1e-5
    scale = params["bn_gamma"] / jnp.sqrt(params["bn_var"] + eps)             # (C,)
    shift = params["bn_beta"] - params["bn_mean"] * scale                     # (C,)
    w_eff = jnp.transpose(params["w_w"] * scale[None, :]).astype(jnp.bfloat16)  # (C, IC)
    b_eff = (params["b_w"] * scale + shift)[:, None]                          # (C, 1) f32

    # ---- kernel 1: packed phi/g conv + fused 2x2 max-pool -> bf16 (C2, Ns) ----
    k1_need = (2 * (4 * N * C + 2 * C * C2 + 4 * C2 + 2 * C2 * Ns)    # double-buffered blocks
               + 2 * N * C + 4 * N * C2 + 4 * Ns * C2)                # bf16 x + pre/post-pool temps
    conv_pool = pl.pallas_call(
        functools.partial(_conv_pool_kernel, H=H, W=W),
        out_shape=jax.ShapeDtypeStruct((B, C2, Ns), jnp.bfloat16),
        grid_spec=pltpu.PrefetchScalarGridSpec(
            num_scalar_prefetch=0,
            grid=(B,),
            in_specs=[
                pl.BlockSpec((1, C, N), lambda b: (b, 0, 0)),
                pl.BlockSpec((C, C2), lambda b: (0, 0)),
                pl.BlockSpec((1, C2), lambda b: (0, 0)),
            ],
            out_specs=pl.BlockSpec((1, C2, Ns), lambda b: (b, 0, 0)),
        ),
        compiler_params=pltpu.CompilerParams(
            dimension_semantics=("parallel",),
            vmem_limit_bytes=_vmem_limit_bytes(k1_need),
        ),
    )
    pg_sub = conv_pool(x_flat, w_pg, b_pg)                                    # (B, C2, Ns) bf16

    # ---- kernel 2: theta conv + attention + W conv + BN + residual -------------
    k2_need = (2 * (4 * C * tq + 2 * C2 * Ns + 2 * IC * C + 4 * IC
                    + 2 * IC * C + 4 * C + 4 * C * tq)                 # double-buffered blocks
               + 2 * C * tq + 4 * IC * tq + 8 * tq * Ns + 2 * tq * Ns  # x bf16, theta, f, p
               + 8 * tq * IC + 4 * C * tq)                             # y, wy
    attn = pl.pallas_call(
        functools.partial(_attn_kernel, IC=IC),
        out_shape=jax.ShapeDtypeStruct((B, C, N), jnp.float32),
        grid_spec=pltpu.PrefetchScalarGridSpec(
            num_scalar_prefetch=0,
            grid=(B, nq),
            in_specs=[
                pl.BlockSpec((1, C, tq), lambda b, q: (b, 0, q)),     # x tile (theta + residual)
                pl.BlockSpec((1, C2, Ns), lambda b, q: (b, 0, 0)),    # pooled [phi; g], resident/batch
                pl.BlockSpec((IC, C), lambda b, q: (0, 0)),           # w_theta (bf16)
                pl.BlockSpec((IC, 1), lambda b, q: (0, 0)),           # b_theta
                pl.BlockSpec((C, IC), lambda b, q: (0, 0)),           # w_w (BN-folded, bf16)
                pl.BlockSpec((C, 1), lambda b, q: (0, 0)),            # b_w (BN-folded)
            ],
            out_specs=pl.BlockSpec((1, C, tq), lambda b, q: (b, 0, q)),
        ),
        compiler_params=pltpu.CompilerParams(
            dimension_semantics=("parallel", "parallel"),
            vmem_limit_bytes=_vmem_limit_bytes(k2_need),
        ),
    )
    z_flat = attn(x_flat, pg_sub, w_th, b_th, w_eff, b_eff)                   # (B, C, N)

    return z_flat.reshape(B, C, H, W)                                         # free reshape


def make_params(key, in_channels):
    """Deterministic parameter init.  Shapes follow NonLocalBlockND.__init__.
    Conv weights are stored as (C_in, C_out) matrices (PyTorch (out,in,1,1) transposed)."""
    C = in_channels
    IC = max(C // 2, 1)
    ks = jax.random.split(key, 9)
    std = 0.1
    params = {
        "w_theta": std * jax.random.normal(ks[0], (C, IC), jnp.float32),
        "b_theta": std * jax.random.normal(ks[1], (1, IC), jnp.float32),
        "w_phi": std * jax.random.normal(ks[2], (C, IC), jnp.float32),
        "b_phi": std * jax.random.normal(ks[3], (1, IC), jnp.float32),
        "w_g": std * jax.random.normal(ks[4], (C, IC), jnp.float32),
        "b_g": std * jax.random.normal(ks[5], (1, IC), jnp.float32),
        "w_w": std * jax.random.normal(ks[6], (IC, C), jnp.float32),
        "b_w": std * jax.random.normal(ks[7], (C,), jnp.float32),
        # BatchNorm2d (inference).  PyTorch init sets gamma=beta=0 (=> W_y==0, z==x);
        # we use non-zero deterministic values so the full path is exercised.
        "bn_gamma": 1.0 + 0.1 * jax.random.normal(ks[8], (C,), jnp.float32),
        "bn_beta": jnp.zeros((C,), jnp.float32),
        "bn_mean": jnp.zeros((C,), jnp.float32),
        "bn_var": jnp.ones((C,), jnp.float32),
    }
    return params


if __name__ == "__main__":
    key = jax.random.PRNGKey(0)
    k_x, k_p = jax.random.split(key)

    # in_channels=32 (as in the module docstring) -> inter_channels=16; N=256, Ns=64.
    B, C, H, W = 2, 32, 16, 16
    x = jax.random.normal(k_x, (B, C, H, W), jnp.float32)
    params = make_params(k_p, C)

    z = non_local_block_nd(x, params, tq=128)   # tq=128 -> two query tiles per batch
    jax.block_until_ready(z)
    assert z.shape == (B, C, H, W)
    print("KERNEL_OK")
</pallas_src>

<mosaic_0001>
module attributes {stable_mosaic.version = 11 : i64} {
  func.func @_conv_pool_kernel(%arg0: i32, %arg1: memref<1x32x256xf32, #tpu.memory_space<vmem>>, %arg2: memref<32x32xbf16, #tpu.memory_space<vmem>>, %arg3: memref<1x32xf32, #tpu.memory_space<vmem>>, %arg4: memref<1x32x64xbf16, #tpu.memory_space<vmem>>) attributes {dimension_semantics = [#tpu.dimension_semantics<parallel>], iteration_bounds = array<i64: 2>, scalar_prefetch = 0 : i64, scratch_operands = 0 : i64, tpu.core_type = #tpu.core_type<tc>, window_params = [{transform_indices = @transform_0, window_bounds = array<i64: 1, 32, 256>}, {pipeline_mode = #tpu.pipeline_mode<synchronous>, transform_indices = @transform_1, window_bounds = array<i64: 32, 32>}, {pipeline_mode = #tpu.pipeline_mode<synchronous>, transform_indices = @transform_2, window_bounds = array<i64: 1, 32>}, {transform_indices = @transform_3, window_bounds = array<i64: 1, 32, 64>}]} {
    %c0 = arith.constant 0 : index
    %c0_0 = arith.constant 0 : index
    %c0_1 = arith.constant 0 : index
    %0 = vector.load %arg1[%c0, %c0_0, %c0_1] : memref<1x32x256xf32, #tpu.memory_space<vmem>>, vector<1x32x256xf32>
    %1 = vector.shape_cast %0 : vector<1x32x256xf32> to vector<32x256xf32>
    %2 = arith.truncf %1 : vector<32x256xf32> to vector<32x256xbf16>
    %c0_2 = arith.constant 0 : index
    %c0_3 = arith.constant 0 : index
    %3 = vector.load %arg2[%c0_2, %c0_3] : memref<32x32xbf16, #tpu.memory_space<vmem>>, vector<32x32xbf16>
    %cst = arith.constant dense<0.000000e+00> : vector<256x32xf32>
    %4 = tpu.matmul %2, %3, %cst {dimension_numbers = #tpu.dot_dimension_numbers<[0], [0], [1], [1], [0, 1, 1, 1], [], []>} : vector<32x256xbf16>, vector<32x32xbf16>, vector<256x32xf32> -> vector<256x32xf32>
    %c0_4 = arith.constant 0 : index
    %c0_5 = arith.constant 0 : index
    %5 = vector.load %arg3[%c0_4, %c0_5] : memref<1x32xf32, #tpu.memory_space<vmem>>, vector<1x32xf32>
    %6 = vector.broadcast %5 : vector<1x32xf32> to vector<256x32xf32>
    %7 = arith.addf %4, %6 : vector<256x32xf32>
    %8 = vector.shape_cast %7 : vector<256x32xf32> to vector<8x32x32xf32>
    %9 = vector.extract_strided_slice %8 {offsets = [0, 0, 0], sizes = [8, 16, 32], strides = [1, 1, 1]} : vector<8x32x32xf32> to vector<8x16x32xf32>
    %10 = vector.extract_strided_slice %8 {offsets = [0, 16, 0], sizes = [8, 16, 32], strides = [1, 1, 1]} : vector<8x32x32xf32> to vector<8x16x32xf32>
    %11 = arith.maximumf %9, %10 : vector<8x16x32xf32>
    %12 = vector.shape_cast %11 : vector<8x16x32xf32> to vector<8x8x2x32xf32>
    %cst_6 = arith.constant dense<0xFF800000> : vector<8x8x32xf32>
    %13 = vector.multi_reduction <maximumf>, %12, %cst_6 [2] : vector<8x8x2x32xf32> to vector<8x8x32xf32>
    %14 = vector.shape_cast %13 : vector<8x8x32xf32> to vector<64x32xf32>
    %15 = tpu.transpose %14, [1, 0] : vector<64x32xf32> -> vector<32x64xf32>
    %16 = arith.truncf %15 : vector<32x64xf32> to vector<32x64xbf16>
    %c0_7 = arith.constant 0 : index
    %c0_8 = arith.constant 0 : index
    %c0_9 = arith.constant 0 : index
    %17 = vector.load %arg4[%c0_7, %c0_8, %c0_9] : memref<1x32x64xbf16, #tpu.memory_space<vmem>>, vector<1x32x64xbf16>
    %18 = vector.shape_cast %17 : vector<1x32x64xbf16> to vector<32x64xbf16>
    %19 = vector.shape_cast %16 : vector<32x64xbf16> to vector<1x32x64xbf16>
    tpu.vector_store %arg4[%c0_7, %c0_8, %c0_9], %19 {strides = array<i32>} : memref<1x32x64xbf16, #tpu.memory_space<vmem>>, vector<1x32x64xbf16>,
    return
  }
  func.func @transform_0(%arg0: i32) -> (i32, i32, i32) {
    %c0_i32 = arith.constant 0 : i32
    %c0_i32_0 = arith.constant 0 : i32
    %c0_i32_1 = arith.constant 0 : i32
    return %arg0, %c0_i32, %c0_i32_0 : i32, i32, i32
  }
  func.func @transform_1(%arg0: i32) -> (i32, i32) {
    %c0_i32 = arith.constant 0 : i32
    %c0_i32_0 = arith.constant 0 : i32
    %c0_i32_1 = arith.constant 0 : i32
    return %c0_i32, %c0_i32_0 : i32, i32
  }
  func.func @transform_2(%arg0: i32) -> (i32, i32) {
    %c0_i32 = arith.constant 0 : i32
    %c0_i32_0 = arith.constant 0 : i32
    %c0_i32_1 = arith.constant 0 : i32
    return %c0_i32, %c0_i32_0 : i32, i32
  }
  func.func @transform_3(%arg0: i32) -> (i32, i32, i32) {
    %c0_i32 = arith.constant 0 : i32
    %c0_i32_0 = arith.constant 0 : i32
    %c0_i32_1 = arith.constant 0 : i32
    return %arg0, %c0_i32, %c0_i32_0 : i32, i32, i32
  }
}

</mosaic_0001>

<llo_original>
// kernel: tpu_custom_call.1
$region0: #{tpu_custom_call.1}
  #allocation0 [shape = 'u32[]', space=smem, size = 0x4, offset = 0x4, fixed_abs, tag = 'smem constant byte address 0x4 - core index']
  #allocation1 [shape = 'u32[144,128]{1,0:T(1,128)}', space=vmem, size = 0x12000, scoped, tag = 'internal scratch']
  %s0 = inlined_call_operand.hbm [shape: f32[2,32,256], index: 0, kind: input, shape index: {}]
  %s1 = inlined_call_operand.hbm [shape: bf16[32,32], index: 1, kind: input, shape index: {}]
  %s2 = inlined_call_operand.vmem [shape: f32[1,32], index: 2, kind: input, shape index: {}]
  %s3 = inlined_call_operand.hbm [shape: bf16[2,32,64], index: 3, kind: output, shape index: {}]
  %s4 = sld [smem:[#allocation0]]
  $region53: #{tpu_custom_call.1} parent=0
    _
  %s6 = ssub.s32 1, %s4
  %s7 = scalar_select 0, %s6, %s4
  $region1: #{tpu_custom_call.1} parent=0
    #allocation2 [shape = 'u8[65536]{0}', space=vmem, size = 0x10000, scoped, tag = 'input window, operand 0']
    #allocation3 [shape = 's32[2]{0}', space=sflag, size = 0x8, scoped, tag = 'scoped memory for tpu_custom_call.1']
    #allocation4 [shape = 's32[2]{0}', space=sflag, size = 0x8, scoped, tag = 'scoped memory for tpu_custom_call.1']
    #allocation5 [shape = 'u8[8192]{0}', space=vmem, size = 0x2000, scoped, tag = 'input window, operand 1, single buffered']
    #allocation6 [shape = 's32[1]{0}', space=sflag, size = 0x4, scoped, tag = 'scoped memory for tpu_custom_call.1']
    #allocation7 [shape = 'u8[16384]{0}', space=vmem, size = 0x4000, scoped, tag = 'output window, operand 0']
    %8 = vsyncpa [#allocation3], 0
    %s9 = scalar_lea.sflag [#allocation3], 1
    %10 = vsyncpa %s9, 0
    %11 = vsyncpa [#allocation6], 0
    %12 = vsyncpa [#allocation4], 0
    %s13 = scalar_lea.sflag [#allocation4], 1
    %14 = vsyncpa %s13, 0
    loop: start=0, step=1, limit=4
    $region2: #{tpu_custom_call.1} parent=1 // loop_pre_header
      _
    $region3: #{tpu_custom_call.1} parent=1 // loop_header
      %s16 = sphi 0, %s20
      %p17 = scmp.ge.s32.totalorder %s16, 4
      %s26 = sphi 0, %s28
      %s29 = sphi 0, %s26
      %s30 = sphi 0, %s29
      %s46 = sphi 0, %s30
      %s50 = sphi 0, %s50
      %s52 = sphi 0, %s50
      %s53 = sphi 0, %s52
      %s67 = sphi 0, %s53
      %s71 = sphi 0, %s71
      %s73 = sphi 0, %s71
      %s74 = sphi 0, %s73
      %s88 = sphi 0, %s74
      %s94 = sphi 0, %s96
      %s97 = sphi 0, %s94
      %s98 = sphi 0, %s97
      %s114 = sphi 0, %s98
    $region4: #{tpu_custom_call.1} parent=1 // loop_header_branch
      %19 = sbr.rel (%p17) target = $region8
    $region5: #{tpu_custom_call.1} parent=1 // loop_body
      %s21 = ssub.s32 %s16, 1
      %s22 = ssub.s32 %s16, 2
      %s23 = sadd.s32 %s16, 1
      %s24 = ssub.s32 %s16, %s23
      %p25 = scmp.eq.s32.totalorder %s24, 0
      %s27 = sadd.s32 %s26, 1
      %s28 = scalar_select %p25, %s26, %s27
      %p31 = pneg %p25
      %p32 = scmp.eq.s32.totalorder %s16, 1
      %p33 = por %p31, %p32
      %p34 = scmp.ne.s32.totalorder %s26, %s29
      %p35 = scmp.eq.s32.totalorder %s16, 0
      %p36 = por %p34, %p35
      %p37 = scmp.ne.s32.totalorder %s26, %s29
      %p38 = scmp.eq.s32.totalorder %s21, 1
      %p39 = por %p37, %p38
      %p40 = scmp.ne.s32.totalorder %s29, %s30
      %p41 = scmp.eq.s32.totalorder %s21, 0
      %p42 = por %p40, %p41
      %p43 = scmp.ne.s32.totalorder %s29, %s30
      %p44 = scmp.eq.s32.totalorder %s22, 1
      %p45 = por %p43, %p44
      %p47 = scmp.ne.s32.totalorder %s30, %s46
      %p48 = scmp.eq.s32.totalorder %s22, 0
      %p49 = por %p47, %p48
      %s51 = sadd.s32 %s50, 1
      %p54 = scmp.eq.s32.totalorder %s16, 1
      %p55 = scmp.ne.s32.totalorder %s50, %s52
      %p56 = scmp.eq.s32.totalorder %s16, 0
      %p57 = por %p55, %p56
      %p58 = scmp.ne.s32.totalorder %s50, %s52
      %p59 = scmp.eq.s32.totalorder %s21, 1
      %p60 = por %p58, %p59
      %p61 = scmp.ne.s32.totalorder %s52, %s53
      %p62 = scmp.eq.s32.totalorder %s21, 0
      %p63 = por %p61, %p62
      %p64 = scmp.ne.s32.totalorder %s52, %s53
      %p65 = scmp.eq.s32.totalorder %s22, 1
      %p66 = por %p64, %p65
      %p68 = scmp.ne.s32.totalorder %s53, %s67
      %p69 = scmp.eq.s32.totalorder %s22, 0
      %p70 = por %p68, %p69
      %s72 = sadd.s32 %s71, 1
      %p75 = scmp.eq.s32.totalorder %s16, 1
      %p76 = scmp.ne.s32.totalorder %s71, %s73
      %p77 = scmp.eq.s32.totalorder %s16, 0
      %p78 = por %p76, %p77
      %p79 = scmp.ne.s32.totalorder %s71, %s73
      %p80 = scmp.eq.s32.totalorder %s21, 1
      %p81 = por %p79, %p80
      %p82 = scmp.ne.s32.totalorder %s73, %s74
      %p83 = scmp.eq.s32.totalorder %s21, 0
      %p84 = por %p82, %p83
      %p85 = scmp.ne.s32.totalorder %s73, %s74
      %p86 = scmp.eq.s32.totalorder %s22, 1
      %p87 = por %p85, %p86
      %p89 = scmp.ne.s32.totalorder %s74, %s88
      %p90 = scmp.eq.s32.totalorder %s22, 0
      %p91 = por %p89, %p90
      %s92 = ssub.s32 %s16, %s23
      %p93 = scmp.eq.s32.totalorder %s92, 0
      %s95 = sadd.s32 %s94, 1
      %s96 = scalar_select %p93, %s94, %s95
      %p99 = pneg %p93
      %p100 = scmp.eq.s32.totalorder %s16, 1
      %p101 = por %p99, %p100
      %p102 = scmp.ne.s32.totalorder %s94, %s97
      %p103 = scmp.eq.s32.totalorder %s16, 0
      %p104 = por %p102, %p103
      %p105 = scmp.ne.s32.totalorder %s94, %s97
      %p106 = scmp.eq.s32.totalorder %s21, 1
      %p107 = por %p105, %p106
      %p108 = scmp.ne.s32.totalorder %s97, %s98
      %p109 = scmp.eq.s32.totalorder %s21, 0
      %p110 = por %p108, %p109
      %p111 = scmp.ne.s32.totalorder %s97, %s98
      %p112 = scmp.eq.s32.totalorder %s22, 1
      %p113 = por %p111, %p112
      %p115 = scmp.ne.s32.totalorder %s98, %s114
      %p116 = scmp.eq.s32.totalorder %s22, 0
      %p117 = por %p115, %p116
      %p118 = scmp.le.s32.totalorder 1, %s16
      %p119 = scmp.lt.s32.totalorder %s16, 3
      %p120 = pnand %p118, %p119
      %p121 = pneg %p120
      // Predicated region
      $region9: #{tpu_custom_call.1} parent=5 // pred_check
        _
      $region10: #{tpu_custom_call.1} parent=5 // pred_check_branch
        %123 = sbr.rel (%p120) target = $region12
      $region11: #{tpu_custom_call.1} parent=5 // pred_region
        %s124 = ssub.s32 %s16, 1
        // Predicated region
        $region13: #{tpu_custom_call.1} parent=11 // pred_check
          %p125 = pneg %p63
        $region14: #{tpu_custom_call.1} parent=11 // pred_check_branch
          %127 = sbr.rel (%p125) target = $region16
        $region15: #{tpu_custom_call.1} parent=11 // pred_region
          %s129 = ssub.s32 256, 256
          %130 = vsyncadd [#allocation6], %s129
          %s131 = sshll.u32 [#allocation5], 4
          %s132 = int_to_ptr.vmem [resolvable:$true] %s131
          %137 = dma.hbm_to_vmem [thread:$0]  %s1, 256, %s132, [#allocation6], 64, 64, 4
        $region16: #{tpu_custom_call.1} parent=11 // pred_fallthru
          _
        // Predicated region
        $region17: #{tpu_custom_call.1} parent=11 // pred_check
          %p138 = pneg %p84
        $region18: #{tpu_custom_call.1} parent=11 // pred_check_branch
          %140 = sbr.rel (%p138) target = $region20
        $region19: #{tpu_custom_call.1} parent=11 // pred_region
          _
        $region20: #{tpu_custom_call.1} parent=11 // pred_fallthru
          _
      $region12: #{tpu_custom_call.1} parent=5 // pred_fallthru
        _
      %p141 = scmp.lt.s32.totalorder %s16, 2
      // Predicated region
      $region21: #{tpu_custom_call.1} parent=5 // pred_check
        %p142 = pneg %p141
      $region22: #{tpu_custom_call.1} parent=5 // pred_check_branch
        %144 = sbr.rel (%p142) target = $region24
      $region23: #{tpu_custom_call.1} parent=5 // pred_region
        // Predicated region
        $region25: #{tpu_custom_call.1} parent=23 // pred_check
          %p145 = pneg %p36
        $region26: #{tpu_custom_call.1} parent=23 // pred_check_branch
          %147 = sbr.rel (%p145) target = $region28
        $region27: #{tpu_custom_call.1} parent=23 // pred_region
          %s148 = sand.u32 %s26, 1
          %s149 = scalar_lea.sflag [#allocation3], %s148
          %s150 = sand.u32 %s26, 1
          %s151 = smul.addr %s150, 64
          %s152 = scalar_lea.vmem [#allocation2], %s151
          %s154 = ssub.s32 1024, 1024
          %155 = vsyncadd %s149, %s154
          %s156 = smul.addr %s16, 8
          %s157 = smul.addr %s156, 128
          %s158 = scalar_lea.hbm %s0, %s157
          %s159 = sshll.u32 %s152, 4
          %s160 = int_to_ptr.vmem [resolvable:$true] %s159
          %165 = dma.hbm_to_vmem [thread:$0]  %s158, 1024, %s160, %s149, 256, 256, 16
        $region28: #{tpu_custom_call.1} parent=23 // pred_fallthru
          _
      $region24: #{tpu_custom_call.1} parent=5 // pred_fallthru
        _
      %p166 = scmp.le.s32.totalorder 1, %s16
      %p167 = scmp.lt.s32.totalorder %s16, 3
      %p168 = pnand %p166, %p167
      %p169 = pneg %p168
      // Predicated region
      $region29: #{tpu_custom_call.1} parent=5 // pred_check
        _
      $region30: #{tpu_custom_call.1} parent=5 // pred_check_branch
        %171 = sbr.rel (%p168) target = $region32
      $region31: #{tpu_custom_call.1} parent=5 // pred_region
        %s172 = ssub.s32 %s16, 1
        %s173 = sand.u32 %s29, 1
        %s174 = scalar_lea.sflag [#allocation3], %s173
        %s175 = sand.u32 %s29, 1
        %s176 = smul.addr %s175, 64
        %s177 = scalar_lea.vmem [#allocation2], %s176
        // Predicated region
        $region33: #{tpu_custom_call.1} parent=31 // pred_check
          %p178 = pneg %p42
        $region34: #{tpu_custom_call.1} parent=31 // pred_check_branch
          %180 = sbr.rel (%p178) target = $region36
        $region35: #{tpu_custom_call.1} parent=31 // pred_region
          %181 = dma.done %s174, 1024
        $region36: #{tpu_custom_call.1} parent=31 // pred_fallthru
          _
        // Predicated region
        $region37: #{tpu_custom_call.1} parent=31 // pred_check
          %p182 = pneg %p63
        $region38: #{tpu_custom_call.1} parent=31 // pred_check_branch
          %184 = sbr.rel (%p182) target = $region40
        $region39: #{tpu_custom_call.1} parent=31 // pred_region
          %185 = dma.done [#allocation6], 256
        $region40: #{tpu_custom_call.1} parent=31 // pred_fallthru
          _
        %s186 = sand.u32 %s29, 1
        %s187 = scalar_lea.sflag [#allocation3], %s186
        %s188 = sand.u32 %s29, 1
        %s189 = smul.addr %s188, 64
        %s190 = scalar_lea.vmem [#allocation2], %s189
        %p191 = pneg %p42
        %p192 = pneg %p39
        %p193 = pneg %p63
        %p194 = pneg %p60
        %p195 = pneg %p84
        %p196 = pneg %p81
        %p197 = pneg %p110
        %p198 = pneg %p107
        %s199 = sand.u32 %s97, 1
        %s200 = scalar_lea.sflag [#allocation4], %s199
        %s201 = sand.u32 %s97, 1
        %s202 = smul.addr %s201, 16
        %s203 = scalar_lea.vmem [#allocation7], %s202
        %v205 = vld [vmem:[%s177] sm:$0xff]
        %v206 = vld [vmem:[%s177 + $0x8] sm:$0xff]
        %v207 = vld [vmem:[%s177 + $0x10] sm:$0xff]
        %v208 = vld [vmem:[%s177 + $0x18] sm:$0xff]
        %v209 = vld [vmem:[%s177 + $0x20] sm:$0xff]
        %v210 = vld [vmem:[%s177 + $0x28] sm:$0xff]
        %v211 = vld [vmem:[%s177 + $0x30] sm:$0xff]
        %v212 = vld [vmem:[%s177 + $0x38] sm:$0xff]
        %v213 = vpack.c.bf16 %v207, %v205
        %v214 = vpack.c.bf16 %v208, %v206
        %v215 = vpack.c.bf16 %v211, %v209
        %v216 = vpack.c.bf16 %v212, %v210
        %v217 = vld [vmem:[#allocation5] sm:$0xf]
        %v218 = vld [vmem:[#allocation5 + $0x4] sm:$0xf]
        %v219 = vld [vmem:[#allocation5 + $0x8] sm:$0xf]
        %v220 = vld [vmem:[#allocation5 + $0xc] sm:$0xf]
        %v221 = vld [vmem:[%s2] sm:$0x1]
        %v223 = vlaneseq
        %v224 = vshrl.u32 %v223, 7
        %v225 = vsub.s32 0, %v224
        %v226 = vrot.slane %v221, %v225
        %228 = vxpose.xlu0.c.b16.start [1/8] %v213, 128
        %229 = vxpose.xlu0.c.b16.cont [2/8] %v215, 128
        %230 = vxpose.xlu0.c.b16.cont [3/8] 0, 128
        %231 = vxpose.xlu0.c.b16.cont [4/8] 0, 128
        %232 = vxpose.xlu0.c.b16.cont [5/8] 0, 128
        %233 = vxpose.xlu0.c.b16.cont [6/8] 0, 128
        %234 = vxpose.xlu0.c.b16.cont [7/8] 0, 128
        %235 = vxpose.xlu0.c.b16.end [8/8] 0, 128
        %v236 = vpop.trf.xlu0
        %v237 = vpop.trf.xlu0
        %v238 = vpop.trf.xlu0
        %v239 = vpop.trf.xlu0
        %v240 = vpop.trf.xlu0
        %v241 = vpop.trf.xlu0
        %v242 = vpop.trf.xlu0
        %v243 = vpop.trf.xlu0
        %244 = vxpose.xlu0.c.b16.start [1/8] %v214, 128
        %245 = vxpose.xlu0.c.b16.cont [2/8] %v216, 128
        %246 = vxpose.xlu0.c.b16.cont [3/8] 0, 128
        %247 = vxpose.xlu0.c.b16.cont [4/8] 0, 128
        %248 = vxpose.xlu0.c.b16.cont [5/8] 0, 128
        %249 = vxpose.xlu0.c.b16.cont [6/8] 0, 128
        %250 = vxpose.xlu0.c.b16.cont [7/8] 0, 128
        %251 = vxpose.xlu0.c.b16.end [8/8] 0, 128
        %v252 = vpop.trf.xlu0
        %v253 = vpop.trf.xlu0
        %v254 = vpop.trf.xlu0
        %v255 = vpop.trf.xlu0
        %v256 = vpop.trf.xlu0
        %v257 = vpop.trf.xlu0
        %v258 = vpop.trf.xlu0
        %v259 = vpop.trf.xlu0
        %v264 = vunpack.c.l.b16 %v217
        %v265 = vunpack.c.l.b16 %v218
        %v266 = vunpack.c.l.b16 %v219
        %v267 = vunpack.c.l.b16 %v220
        %v268 = vpack.c.b16 %v265, %v264
        %v269 = vpack.c.b16 %v267, %v266
        %vm272 = vcmask 261120
        %v274 = vsel %vm272, %v236, 0
        %v277 = vsel %vm272, %v237, 0
        %v280 = vsel %vm272, %v238, 0
        %v283 = vsel %vm272, %v239, 0
        %v286 = vsel %vm272, %v240, 0
        %v289 = vsel %vm272, %v241, 0
        %v292 = vsel %vm272, %v242, 0
        %v295 = vsel %vm272, %v243, 0
        %v298 = vsel %vm272, %v252, 0
        %v301 = vsel %vm272, %v253, 0
        %v304 = vsel %vm272, %v254, 0
        %v307 = vsel %vm272, %v255, 0
        %v310 = vsel %vm272, %v256, 0
        %v313 = vsel %vm272, %v257, 0
        %v316 = vsel %vm272, %v258, 0
        %v319 = vsel %vm272, %v259, 0
        %321 = vmatprep.subr.bf16.mxu0 0
        %322 = vmatpush1.bf16.msra.mxu0 %v268
        %323 = vmatprep.subr.bf16.mxu0 0
        %324 = vmatpush1.bf16.msra.mxu0 %v269
        %325 = vmatprep.subr.bf16.mxu0 0
        %326 = vmatpush1.bf16.msra.mxu0 0
        %327 = vmatprep.subr.bf16.mxu0 0
        %328 = vmatpush1.bf16.msra.mxu0 0
        %329 = vmatprep.subr.bf16.mxu0 0
        %330 = vmatpush1.bf16.msra.mxu0 0
        %331 = vmatprep.subr.bf16.mxu0 0
        %332 = vmatpush1.bf16.msra.mxu0 0
        %333 = vmatprep.subr.bf16.mxu0 0
        %334 = vmatpush1.bf16.msra.mxu0 0
        %335 = vmatprep.subr.bf16.mxu0 0
        %336 = vmatpush1.bf16.msra.mxu0 0
        %337 = vmatprep.subr.bf16.mxu0 0
        %338 = vmatpush1.bf16.msra.mxu0 0
        %339 = vmatprep.subr.bf16.mxu0 0
        %340 = vmatpush1.bf16.msra.mxu0 0
        %341 = vmatprep.subr.bf16.mxu0 0
        %342 = vmatpush1.bf16.msra.mxu0 0
        %343 = vmatprep.subr.bf16.mxu0 0
        %344 = vmatpush1.bf16.msra.mxu0 0
        %345 = vmatprep.subr.bf16.mxu0 0
        %346 = vmatpush1.bf16.msra.mxu0 0
        %347 = vmatprep.subr.bf16.mxu0 0
        %348 = vmatpush1.bf16.msra.mxu0 0
        %349 = vmatprep.subr.bf16.mxu0 0
        %350 = vmatpush1.bf16.msra.mxu0 0
        %351 = vmatprep.subr.bf16.mxu0 0
        %352 = vmatpush1.bf16.msra.mxu0 0
        %353 = vmatprep.mubr.bf16.mxu0 0
        %354 = vmatmul.mubr.bf16.gmra.mrb[0].mxu0 %v274
        %v355 = vpop.f32.mrb[0].mxu0
        %v356 = vadd.f32 %v226, %v355
        %v357 = vpop.f32.mrb[0].mxu0
        %v358 = vpop.f32.mrb[0].mxu0
        %v359 = vadd.f32 %v226, %v358
        %v360 = vpop.f32.mrb[0].mxu0
        %361 = vmatprep.mubr.bf16.mxu0 0
        %362 = vmatmul.mubr.bf16.gmra.mrb[0].mxu0 %v277
        %v363 = vpop.f32.mrb[0].mxu0
        %v364 = vadd.f32 %v226, %v363
        %v365 = vpop.f32.mrb[0].mxu0
        %v366 = vpop.f32.mrb[0].mxu0
        %v367 = vadd.f32 %v226, %v366
        %v368 = vpop.f32.mrb[0].mxu0
        %369 = vmatprep.mubr.bf16.mxu0 0
        %370 = vmatmul.mubr.bf16.gmra.mrb[0].mxu0 %v280
        %v371 = vpop.f32.mrb[0].mxu0
        %v372 = vadd.f32 %v226, %v371
        %v373 = vpop.f32.mrb[0].mxu0
        %v374 = vpop.f32.mrb[0].mxu0
        %v375 = vadd.f32 %v226, %v374
        %v376 = vpop.f32.mrb[0].mxu0
        %377 = vmatprep.mubr.bf16.mxu0 0
        %378 = vmatmul.mubr.bf16.gmra.mrb[0].mxu0 %v283
        %v379 = vpop.f32.mrb[0].mxu0
        %v380 = vadd.f32 %v226, %v379
        %v381 = vpop.f32.mrb[0].mxu0
        %v382 = vpop.f32.mrb[0].mxu0
        %v383 = vadd.f32 %v226, %v382
        %v384 = vpop.f32.mrb[0].mxu0
        %385 = vmatprep.mubr.bf16.mxu0 0
        %386 = vmatmul.mubr.bf16.gmra.mrb[0].mxu0 %v286
        %v387 = vpop.f32.mrb[0].mxu0
        %v388 = vadd.f32 %v226, %v387
        %v389 = vpop.f32.mrb[0].mxu0
        %v390 = vpop.f32.mrb[0].mxu0
        %v391 = vadd.f32 %v226, %v390
        %v392 = vpop.f32.mrb[0].mxu0
        %393 = vmatprep.mubr.bf16.mxu0 0
        %394 = vmatmul.mubr.bf16.gmra.mrb[0].mxu0 %v289
        %v395 = vpop.f32.mrb[0].mxu0
        %v396 = vadd.f32 %v226, %v395
        %v397 = vpop.f32.mrb[0].mxu0
        %v398 = vpop.f32.mrb[0].mxu0
        %v399 = vadd.f32 %v226, %v398
        %v400 = vpop.f32.mrb[0].mxu0
        %401 = vmatprep.mubr.bf16.mxu0 0
        %402 = vmatmul.mubr.bf16.gmra.mrb[0].mxu0 %v292
        %v403 = vpop.f32.mrb[0].mxu0
        %v404 = vadd.f32 %v226, %v403
        %v405 = vpop.f32.mrb[0].mxu0
        %v406 = vpop.f32.mrb[0].mxu0
        %v407 = vadd.f32 %v226, %v406
        %v408 = vpop.f32.mrb[0].mxu0
        %409 = vmatprep.mubr.bf16.mxu0 0
        %410 = vmatmul.mubr.bf16.gmra.mrb[0].mxu0 %v295
        %v411 = vpop.f32.mrb[0].mxu0
        %v412 = vadd.f32 %v226, %v411
        %v413 = vpop.f32.mrb[0].mxu0
        %v414 = vpop.f32.mrb[0].mxu0
        %v415 = vadd.f32 %v226, %v414
        %v416 = vpop.f32.mrb[0].mxu0
        %417 = vmatprep.mubr.bf16.mxu0 0
        %418 = vmatmul.mubr.bf16.gmra.mrb[0].mxu0 %v298
        %v419 = vpop.f32.mrb[0].mxu0
        %v420 = vadd.f32 %v226, %v419
        %v421 = vpop.f32.mrb[0].mxu0
        %v422 = vpop.f32.mrb[0].mxu0
        %v423 = vadd.f32 %v226, %v422
        %v424 = vpop.f32.mrb[0].mxu0
        %425 = vmatprep.mubr.bf16.mxu0 0
        %426 = vmatmul.mubr.bf16.gmra.mrb[0].mxu0 %v301
        %v427 = vpop.f32.mrb[0].mxu0
        %v428 = vadd.f32 %v226, %v427
        %v429 = vpop.f32.mrb[0].mxu0
        %v430 = vpop.f32.mrb[0].mxu0
        %v431 = vadd.f32 %v226, %v430
        %v432 = vpop.f32.mrb[0].mxu0
        %433 = vmatprep.mubr.bf16.mxu0 0
        %434 = vmatmul.mubr.bf16.gmra.mrb[0].mxu0 %v304
        %v435 = vpop.f32.mrb[0].mxu0
        %v436 = vadd.f32 %v226, %v435
        %v437 = vpop.f32.mrb[0].mxu0
        %v438 = vpop.f32.mrb[0].mxu0
        %v439 = vadd.f32 %v226, %v438
        %v440 = vpop.f32.mrb[0].mxu0
        %441 = vmatprep.mubr.bf16.mxu0 0
        %442 = vmatmul.mubr.bf16.gmra.mrb[0].mxu0 %v307
        %v443 = vpop.f32.mrb[0].mxu0
        %v444 = vadd.f32 %v226, %v443
        %v445 = vpop.f32.mrb[0].mxu0
        %v446 = vpop.f32.mrb[0].mxu0
        %v447 = vadd.f32 %v226, %v446
        %v448 = vpop.f32.mrb[0].mxu0
        %449 = vmatprep.mubr.bf16.mxu0 0
        %450 = vmatmul.mubr.bf16.gmra.mrb[0].mxu0 %v310
        %v451 = vpop.f32.mrb[0].mxu0
        %v452 = vadd.f32 %v226, %v451
        %v453 = vpop.f32.mrb[0].mxu0
        %v454 = vpop.f32.mrb[0].mxu0
        %v455 = vadd.f32 %v226, %v454
        %v456 = vpop.f32.mrb[0].mxu0
        %457 = vmatprep.mubr.bf16.mxu0 0
        %458 = vmatmul.mubr.bf16.gmra.mrb[0].mxu0 %v313
        %v459 = vpop.f32.mrb[0].mxu0
        %v460 = vadd.f32 %v226, %v459
        %v461 = vpop.f32.mrb[0].mxu0
        %v462 = vpop.f32.mrb[0].mxu0
        %v463 = vadd.f32 %v226, %v462
        %v464 = vpop.f32.mrb[0].mxu0
        %465 = vmatprep.mubr.bf16.mxu0 0
        %466 = vmatmul.mubr.bf16.gmra.mrb[0].mxu0 %v316
        %v467 = vpop.f32.mrb[0].mxu0
        %v468 = vadd.f32 %v226, %v467
        %v469 = vpop.f32.mrb[0].mxu0
        %v470 = vpop.f32.mrb[0].mxu0
        %v471 = vadd.f32 %v226, %v470
        %v472 = vpop.f32.mrb[0].mxu0
        %473 = vmatprep.mubr.bf16.mxu0 0
        %474 = vmatmul.mubr.bf16.gmra.mrb[0].mxu0 %v319
        %v475 = vpop.f32.mrb[0].mxu0
        %v476 = vadd.f32 %v226, %v475
        %v477 = vpop.f32.mrb[0].mxu0
        %v478 = vpop.f32.mrb[0].mxu0
        %v479 = vadd.f32 %v226, %v478
        %v480 = vpop.f32.mrb[0].mxu0
        %481 = vdwg.mxu0
        %v482 = vmax.f32 %v356, %v364
        %v483 = vmax.f32 %v359, %v367
        %v484 = vmax.f32 %v372, %v380
        %v485 = vmax.f32 %v375, %v383
        %v486 = vmax.f32 %v388, %v396
        %v487 = vmax.f32 %v391, %v399
        %v488 = vmax.f32 %v404, %v412
        %v489 = vmax.f32 %v407, %v415
        %v490 = vmax.f32 %v420, %v428
        %v491 = vmax.f32 %v423, %v431
        %v492 = vmax.f32 %v436, %v444
        %v493 = vmax.f32 %v439, %v447
        %v494 = vmax.f32 %v452, %v460
        %v495 = vmax.f32 %v455, %v463
        %v496 = vmax.f32 %v468, %v476
        %v497 = vmax.f32 %v471, %v479
        %v514 = vcombine.high %v482, %v482
        %v516 = vunpack.c.l.s4 1983009808
        %v517 = vunpack.c.0.s8 %v516
        %v518 = vlaneseq
        %v519 = vshrl.u32 %v518, 7
        %v520 = vsub.s32 %v517, %v519
        %v521 = vrot.slane %v482, %v520
        %v523 = vunpack.c.l.s4 1983009808
        %v524 = vunpack.c.0.s8 %v523
        %v525 = vlaneseq
        %v526 = vshrl.u32 %v525, 7
        %v527 = vsub.s32 %v524, %v526
        %v528 = vrot.slane %v514, %v527
        %v529 = vcombine.high %v521, %v521
        %v530 = vcombine.high %v528, %v528
        %v531 = vcombine.high %v483, %v483
        %v533 = vunpack.c.l.s4 1983009808
        %v534 = vunpack.c.0.s8 %v533
        %v535 = vlaneseq
        %v536 = vshrl.u32 %v535, 7
        %v537 = vsub.s32 %v534, %v536
        %v538 = vrot.slane %v483, %v537
        %v540 = vunpack.c.l.s4 1983009808
        %v541 = vunpack.c.0.s8 %v540
        %v542 = vlaneseq
        %v543 = vshrl.u32 %v542, 7
        %v544 = vsub.s32 %v541, %v543
        %v545 = vrot.slane %v531, %v544
        %v546 = vcombine.high %v538, %v538
        %v547 = vcombine.high %v545, %v545
        %v548 = vcombine.high %v484, %v484
        %v550 = vunpack.c.l.s4 1983009808
        %v551 = vunpack.c.0.s8 %v550
        %v552 = vlaneseq
        %v553 = vshrl.u32 %v552, 7
        %v554 = vsub.s32 %v551, %v553
        %v555 = vrot.slane %v484, %v554
        %v557 = vunpack.c.l.s4 1983009808
        %v558 = vunpack.c.0.s8 %v557
        %v559 = vlaneseq
        %v560 = vshrl.u32 %v559, 7
        %v561 = vsub.s32 %v558, %v560
        %v562 = vrot.slane %v548, %v561
        %v563 = vcombine.high %v555, %v555
        %v564 = vcombine.high %v562, %v562
        %v565 = vcombine.high %v485, %v485
        %v567 = vunpack.c.l.s4 1983009808
        %v568 = vunpack.c.0.s8 %v567
        %v569 = vlaneseq
        %v570 = vshrl.u32 %v569, 7
        %v571 = vsub.s32 %v568, %v570
        %v572 = vrot.slane %v485, %v571
        %v574 = vunpack.c.l.s4 1983009808
        %v575 = vunpack.c.0.s8 %v574
        %v576 = vlaneseq
        %v577 = vshrl.u32 %v576, 7
        %v578 = vsub.s32 %v575, %v577
        %v579 = vrot.slane %v565, %v578
        %v580 = vcombine.high %v572, %v572
        %v581 = vcombine.high %v579, %v579
        %v582 = vcombine.high %v486, %v486
        %v584 = vunpack.c.l.s4 1983009808
        %v585 = vunpack.c.0.s8 %v584
        %v586 = vlaneseq
        %v587 = vshrl.u32 %v586, 7
        %v588 = vsub.s32 %v585, %v587
        %v589 = vrot.slane %v486, %v588
        %v591 = vunpack.c.l.s4 1983009808
        %v592 = vunpack.c.0.s8 %v591
        %v593 = vlaneseq
        %v594 = vshrl.u32 %v593, 7
        %v595 = vsub.s32 %v592, %v594
        %v596 = vrot.slane %v582, %v595
        %v597 = vcombine.high %v589, %v589
        %v598 = vcombine.high %v596, %v596
        %v599 = vcombine.high %v487, %v487
        %v601 = vunpack.c.l.s4 1983009808
        %v602 = vunpack.c.0.s8 %v601
        %v603 = vlaneseq
        %v604 = vshrl.u32 %v603, 7
        %v605 = vsub.s32 %v602, %v604
        %v606 = vrot.slane %v487, %v605
        %v608 = vunpack.c.l.s4 1983009808
        %v609 = vunpack.c.0.s8 %v608
        %v610 = vlaneseq
        %v611 = vshrl.u32 %v610, 7
        %v612 = vsub.s32 %v609, %v611
        %v613 = vrot.slane %v599, %v612
        %v614 = vcombine.high %v606, %v606
        %v615 = vcombine.high %v613, %v613
        %v616 = vcombine.high %v488, %v488
        %v618 = vunpack.c.l.s4 1983009808
        %v619 = vunpack.c.0.s8 %v618
        %v620 = vlaneseq
        %v621 = vshrl.u32 %v620, 7
        %v622 = vsub.s32 %v619, %v621
        %v623 = vrot.slane %v488, %v622
        %v625 = vunpack.c.l.s4 1983009808
        %v626 = vunpack.c.0.s8 %v625
        %v627 = vlaneseq
        %v628 = vshrl.u32 %v627, 7
        %v629 = vsub.s32 %v626, %v628
        %v630 = vrot.slane %v616, %v629
        %v631 = vcombine.high %v623, %v623
        %v632 = vcombine.high %v630, %v630
        %v633 = vcombine.high %v489, %v489
        %v635 = vunpack.c.l.s4 1983009808
        %v636 = vunpack.c.0.s8 %v635
        %v637 = vlaneseq
        %v638 = vshrl.u32 %v637, 7
        %v639 = vsub.s32 %v636, %v638
        %v640 = vrot.slane %v489, %v639
        %v642 = vunpack.c.l.s4 1983009808
        %v643 = vunpack.c.0.s8 %v642
        %v644 = vlaneseq
        %v645 = vshrl.u32 %v644, 7
        %v646 = vsub.s32 %v643, %v645
        %v647 = vrot.slane %v633, %v646
        %v648 = vcombine.high %v640, %v640
        %v649 = vcombine.high %v647, %v647
        %v650 = vcombine.high %v490, %v490
        %v652 = vunpack.c.l.s4 1983009808
        %v653 = vunpack.c.0.s8 %v652
        %v654 = vlaneseq
        %v655 = vshrl.u32 %v654, 7
        %v656 = vsub.s32 %v653, %v655
        %v657 = vrot.slane %v490, %v656
        %v659 = vunpack.c.l.s4 1983009808
        %v660 = vunpack.c.0.s8 %v659
        %v661 = vlaneseq
        %v662 = vshrl.u32 %v661, 7
        %v663 = vsub.s32 %v660, %v662
        %v664 = vrot.slane %v650, %v663
        %v665 = vcombine.high %v657, %v657
        %v666 = vcombine.high %v664, %v664
        %v667 = vcombine.high %v491, %v491
        %v669 = vunpack.c.l.s4 1983009808
        %v670 = vunpack.c.0.s8 %v669
        %v671 = vlaneseq
        %v672 = vshrl.u32 %v671, 7
        %v673 = vsub.s32 %v670, %v672
        %v674 = vrot.slane %v491, %v673
        %v676 = vunpack.c.l.s4 1983009808
        %v677 = vunpack.c.0.s8 %v676
        %v678 = vlaneseq
        %v679 = vshrl.u32 %v678, 7
        %v680 = vsub.s32 %v677, %v679
        %v681 = vrot.slane %v667, %v680
        %v682 = vcombine.high %v674, %v674
        %v683 = vcombine.high %v681, %v681
        %v684 = vcombine.high %v492, %v492
        %v686 = vunpack.c.l.s4 1983009808
        %v687 = vunpack.c.0.s8 %v686
        %v688 = vlaneseq
        %v689 = vshrl.u32 %v688, 7
        %v690 = vsub.s32 %v687, %v689
        %v691 = vrot.slane %v492, %v690
        %v693 = vunpack.c.l.s4 1983009808
        %v694 = vunpack.c.0.s8 %v693
        %v695 = vlaneseq
        %v696 = vshrl.u32 %v695, 7
        %v697 = vsub.s32 %v694, %v696
        %v698 = vrot.slane %v684, %v697
        %v699 = vcombine.high %v691, %v691
        %v700 = vcombine.high %v698, %v698
        %v701 = vcombine.high %v493, %v493
        %v703 = vunpack.c.l.s4 1983009808
        %v704 = vunpack.c.0.s8 %v703
        %v705 = vlaneseq
        %v706 = vshrl.u32 %v705, 7
        %v707 = vsub.s32 %v704, %v706
        %v708 = vrot.slane %v493, %v707
        %v710 = vunpack.c.l.s4 1983009808
        %v711 = vunpack.c.0.s8 %v710
        %v712 = vlaneseq
        %v713 = vshrl.u32 %v712, 7
        %v714 = vsub.s32 %v711, %v713
        %v715 = vrot.slane %v701, %v714
        %v716 = vcombine.high %v708, %v708
        %v717 = vcombine.high %v715, %v715
        %v718 = vcombine.high %v494, %v494
        %v720 = vunpack.c.l.s4 1983009808
        %v721 = vunpack.c.0.s8 %v720
        %v722 = vlaneseq
        %v723 = vshrl.u32 %v722, 7
        %v724 = vsub.s32 %v721, %v723
        %v725 = vrot.slane %v494, %v724
        %v727 = vunpack.c.l.s4 1983009808
        %v728 = vunpack.c.0.s8 %v727
        %v729 = vlaneseq
        %v730 = vshrl.u32 %v729, 7
        %v731 = vsub.s32 %v728, %v730
        %v732 = vrot.slane %v718, %v731
        %v733 = vcombine.high %v725, %v725
        %v734 = vcombine.high %v732, %v732
        %v735 = vcombine.high %v495, %v495
        %v737 = vunpack.c.l.s4 1983009808
        %v738 = vunpack.c.0.s8 %v737
        %v739 = vlaneseq
        %v740 = vshrl.u32 %v739, 7
        %v741 = vsub.s32 %v738, %v740
        %v742 = vrot.slane %v495, %v741
        %v744 = vunpack.c.l.s4 1983009808
        %v745 = vunpack.c.0.s8 %v744
        %v746 = vlaneseq
        %v747 = vshrl.u32 %v746, 7
        %v748 = vsub.s32 %v745, %v747
        %v749 = vrot.slane %v735, %v748
        %v750 = vcombine.high %v742, %v742
        %v751 = vcombine.high %v749, %v749
        %v752 = vcombine.high %v496, %v496
        %v754 = vunpack.c.l.s4 1983009808
        %v755 = vunpack.c.0.s8 %v754
        %v756 = vlaneseq
        %v757 = vshrl.u32 %v756, 7
        %v758 = vsub.s32 %v755, %v757
        %v759 = vrot.slane %v496, %v758
        %v761 = vunpack.c.l.s4 1983009808
        %v762 = vunpack.c.0.s8 %v761
        %v763 = vlaneseq
        %v764 = vshrl.u32 %v763, 7
        %v765 = vsub.s32 %v762, %v764
        %v766 = vrot.slane %v752, %v765
        %v767 = vcombine.high %v759, %v759
        %v768 = vcombine.high %v766, %v766
        %v769 = vcombine.high %v497, %v497
        %v771 = vunpack.c.l.s4 1983009808
        %v772 = vunpack.c.0.s8 %v771
        %v773 = vlaneseq
        %v774 = vshrl.u32 %v773, 7
        %v775 = vsub.s32 %v772, %v774
        %v776 = vrot.slane %v497, %v775
        %v778 = vunpack.c.l.s4 1983009808
        %v779 = vunpack.c.0.s8 %v778
        %v780 = vlaneseq
        %v781 = vshrl.u32 %v780, 7
        %v782 = vsub.s32 %v779, %v781
        %v783 = vrot.slane %v769, %v782
        %v784 = vcombine.high %v776, %v776
        %v785 = vcombine.high %v783, %v783
        %vm850 = vcmask 254976
        %v851 = vsel %vm850, %v521, -inf
        %v852 = vrot.slane %v851, 4
        %v853 = vmax.f32 %v851, %v852
        %v854 = vrot.slane %v853, 2
        %v855 = vmax.f32 %v853, %v854
        %v856 = vrot.slane %v855, 1
        %v857 = vmax.f32 %v855, %v856
        %v858 = vsel %vm850, %v529, -inf
        %v859 = vrot.slane %v858, 4
        %v860 = vmax.f32 %v858, %v859
        %v861 = vrot.slane %v860, 2
        %v862 = vmax.f32 %v860, %v861
        %v863 = vrot.slane %v862, 1
        %v864 = vmax.f32 %v862, %v863
        %v865 = vsel %vm850, %v528, -inf
        %v866 = vrot.slane %v865, 4
        %v867 = vmax.f32 %v865, %v866
        %v868 = vrot.slane %v867, 2
        %v869 = vmax.f32 %v867, %v868
        %v870 = vrot.slane %v869, 1
        %v871 = vmax.f32 %v869, %v870
        %v872 = vsel %vm850, %v530, -inf
        %v873 = vrot.slane %v872, 4
        %v874 = vmax.f32 %v872, %v873
        %v875 = vrot.slane %v874, 2
        %v876 = vmax.f32 %v874, %v875
        %v877 = vrot.slane %v876, 1
        %v878 = vmax.f32 %v876, %v877
        %v879 = vsel %vm850, %v538, -inf
        %v880 = vrot.slane %v879, 4
        %v881 = vmax.f32 %v879, %v880
        %v882 = vrot.slane %v881, 2
        %v883 = vmax.f32 %v881, %v882
        %v884 = vrot.slane %v883, 1
        %v885 = vmax.f32 %v883, %v884
        %v886 = vsel %vm850, %v546, -inf
        %v887 = vrot.slane %v886, 4
        %v888 = vmax.f32 %v886, %v887
        %v889 = vrot.slane %v888, 2
        %v890 = vmax.f32 %v888, %v889
        %v891 = vrot.slane %v890, 1
        %v892 = vmax.f32 %v890, %v891
        %v893 = vsel %vm850, %v545, -inf
        %v894 = vrot.slane %v893, 4
        %v895 = vmax.f32 %v893, %v894
        %v896 = vrot.slane %v895, 2
        %v897 = vmax.f32 %v895, %v896
        %v898 = vrot.slane %v897, 1
        %v899 = vmax.f32 %v897, %v898
        %v900 = vsel %vm850, %v547, -inf
        %v901 = vrot.slane %v900, 4
        %v902 = vmax.f32 %v900, %v901
        %v903 = vrot.slane %v902, 2
        %v904 = vmax.f32 %v902, %v903
        %v905 = vrot.slane %v904, 1
        %v906 = vmax.f32 %v904, %v905
        %v907 = vsel %vm850, %v555, -inf
        %v908 = vrot.slane %v907, 4
        %v909 = vmax.f32 %v907, %v908
        %v910 = vrot.slane %v909, 2
        %v911 = vmax.f32 %v909, %v910
        %v912 = vrot.slane %v911, 1
        %v913 = vmax.f32 %v911, %v912
        %v914 = vsel %vm850, %v563, -inf
        %v915 = vrot.slane %v914, 4
        %v916 = vmax.f32 %v914, %v915
        %v917 = vrot.slane %v916, 2
        %v918 = vmax.f32 %v916, %v917
        %v919 = vrot.slane %v918, 1
        %v920 = vmax.f32 %v918, %v919
        %v921 = vsel %vm850, %v562, -inf
        %v922 = vrot.slane %v921, 4
        %v923 = vmax.f32 %v921, %v922
        %v924 = vrot.slane %v923, 2
        %v925 = vmax.f32 %v923, %v924
        %v926 = vrot.slane %v925, 1
        %v927 = vmax.f32 %v925, %v926
        %v928 = vsel %vm850, %v564, -inf
        %v929 = vrot.slane %v928, 4
        %v930 = vmax.f32 %v928, %v929
        %v931 = vrot.slane %v930, 2
        %v932 = vmax.f32 %v930, %v931
        %v933 = vrot.slane %v932, 1
        %v934 = vmax.f32 %v932, %v933
        %v935 = vsel %vm850, %v572, -inf
        %v936 = vrot.slane %v935, 4
        %v937 = vmax.f32 %v935, %v936
        %v938 = vrot.slane %v937, 2
        %v939 = vmax.f32 %v937, %v938
        %v940 = vrot.slane %v939, 1
        %v941 = vmax.f32 %v939, %v940
        %v942 = vsel %vm850, %v580, -inf
        %v943 = vrot.slane %v942, 4
        %v944 = vmax.f32 %v942, %v943
        %v945 = vrot.slane %v944, 2
        %v946 = vmax.f32 %v944, %v945
        %v947 = vrot.slane %v946, 1
        %v948 = vmax.f32 %v946, %v947
        %v949 = vsel %vm850, %v579, -inf
        %v950 = vrot.slane %v949, 4
        %v951 = vmax.f32 %v949, %v950
        %v952 = vrot.slane %v951, 2
        %v953 = vmax.f32 %v951, %v952
        %v954 = vrot.slane %v953, 1
        %v955 = vmax.f32 %v953, %v954
        %v956 = vsel %vm850, %v581, -inf
        %v957 = vrot.slane %v956, 4
        %v958 = vmax.f32 %v956, %v957
        %v959 = vrot.slane %v958, 2
        %v960 = vmax.f32 %v958, %v959
        %v961 = vrot.slane %v960, 1
        %v962 = vmax.f32 %v960, %v961
        %v963 = vsel %vm850, %v589, -inf
        %v964 = vrot.slane %v963, 4
        %v965 = vmax.f32 %v963, %v964
        %v966 = vrot.slane %v965, 2
        %v967 = vmax.f32 %v965, %v966
        %v968 = vrot.slane %v967, 1
        %v969 = vmax.f32 %v967, %v968
        %v970 = vsel %vm850, %v597, -inf
        %v971 = vrot.slane %v970, 4
        %v972 = vmax.f32 %v970, %v971
        %v973 = vrot.slane %v972, 2
        %v974 = vmax.f32 %v972, %v973
        %v975 = vrot.slane %v974, 1
        %v976 = vmax.f32 %v974, %v975
        %v977 = vsel %vm850, %v596, -inf
        %v978 = vrot.slane %v977, 4
        %v979 = vmax.f32 %v977, %v978
        %v980 = vrot.slane %v979, 2
        %v981 = vmax.f32 %v979, %v980
        %v982 = vrot.slane %v981, 1
        %v983 = vmax.f32 %v981, %v982
        %v984 = vsel %vm850, %v598, -inf
        %v985 = vrot.slane %v984, 4
        %v986 = vmax.f32 %v984, %v985
        %v987 = vrot.slane %v986, 2
        %v988 = vmax.f32 %v986, %v987
        %v989 = vrot.slane %v988, 1
        %v990 = vmax.f32 %v988, %v989
        %v991 = vsel %vm850, %v606, -inf
        %v992 = vrot.slane %v991, 4
        %v993 = vmax.f32 %v991, %v992
        %v994 = vrot.slane %v993, 2
        %v995 = vmax.f32 %v993, %v994
        %v996 = vrot.slane %v995, 1
        %v997 = vmax.f32 %v995, %v996
        %v998 = vsel %vm850, %v614, -inf
        %v999 = vrot.slane %v998, 4
        %v1000 = vmax.f32 %v998, %v999
        %v1001 = vrot.slane %v1000, 2
        %v1002 = vmax.f32 %v1000, %v1001
        %v1003 = vrot.slane %v1002, 1
        %v1004 = vmax.f32 %v1002, %v1003
        %v1005 = vsel %vm850, %v613, -inf
        %v1006 = vrot.slane %v1005, 4
        %v1007 = vmax.f32 %v1005, %v1006
        %v1008 = vrot.slane %v1007, 2
        %v1009 = vmax.f32 %v1007, %v1008
        %v1010 = vrot.slane %v1009, 1
        %v1011 = vmax.f32 %v1009, %v1010
        %v1012 = vsel %vm850, %v615, -inf
        %v1013 = vrot.slane %v1012, 4
        %v1014 = vmax.f32 %v1012, %v1013
        %v1015 = vrot.slane %v1014, 2
        %v1016 = vmax.f32 %v1014, %v1015
        %v1017 = vrot.slane %v1016, 1
        %v1018 = vmax.f32 %v1016, %v1017
        %v1019 = vsel %vm850, %v623, -inf
        %v1020 = vrot.slane %v1019, 4
        %v1021 = vmax.f32 %v1019, %v1020
        %v1022 = vrot.slane %v1021, 2
        %v1023 = vmax.f32 %v1021, %v1022
        %v1024 = vrot.slane %v1023, 1
        %v1025 = vmax.f32 %v1023, %v1024
        %v1026 = vsel %vm850, %v631, -inf
        %v1027 = vrot.slane %v1026, 4
        %v1028 = vmax.f32 %v1026, %v1027
        %v1029 = vrot.slane %v1028, 2
        %v1030 = vmax.f32 %v1028, %v1029
        %v1031 = vrot.slane %v1030, 1
        %v1032 = vmax.f32 %v1030, %v1031
        %v1033 = vsel %vm850, %v630, -inf
        %v1034 = vrot.slane %v1033, 4
        %v1035 = vmax.f32 %v1033, %v1034
        %v1036 = vrot.slane %v1035, 2
        %v1037 = vmax.f32 %v1035, %v1036
        %v1038 = vrot.slane %v1037, 1
        %v1039 = vmax.f32 %v1037, %v1038
        %v1040 = vsel %vm850, %v632, -inf
        %v1041 = vrot.slane %v1040, 4
        %v1042 = vmax.f32 %v1040, %v1041
        %v1043 = vrot.slane %v1042, 2
        %v1044 = vmax.f32 %v1042, %v1043
        %v1045 = vrot.slane %v1044, 1
        %v1046 = vmax.f32 %v1044, %v1045
        %v1047 = vsel %vm850, %v640, -inf
        %v1048 = vrot.slane %v1047, 4
        %v1049 = vmax.f32 %v1047, %v1048
        %v1050 = vrot.slane %v1049, 2
        %v1051 = vmax.f32 %v1049, %v1050
        %v1052 = vrot.slane %v1051, 1
        %v1053 = vmax.f32 %v1051, %v1052
        %v1054 = vsel %vm850, %v648, -inf
        %v1055 = vrot.slane %v1054, 4
        %v1056 = vmax.f32 %v1054, %v1055
        %v1057 = vrot.slane %v1056, 2
        %v1058 = vmax.f32 %v1056, %v1057
        %v1059 = vrot.slane %v1058, 1
        %v1060 = vmax.f32 %v1058, %v1059
        %v1061 = vsel %vm850, %v647, -inf
        %v1062 = vrot.slane %v1061, 4
        %v1063 = vmax.f32 %v1061, %v1062
        %v1064 = vrot.slane %v1063, 2
        %v1065 = vmax.f32 %v1063, %v1064
        %v1066 = vrot.slane %v1065, 1
        %v1067 = vmax.f32 %v1065, %v1066
        %v1068 = vsel %vm850, %v649, -inf
        %v1069 = vrot.slane %v1068, 4
        %v1070 = vmax.f32 %v1068, %v1069
        %v1071 = vrot.slane %v1070, 2
        %v1072 = vmax.f32 %v1070, %v1071
        %v1073 = vrot.slane %v1072, 1
        %v1074 = vmax.f32 %v1072, %v1073
        %v1075 = vsel %vm850, %v657, -inf
        %v1076 = vrot.slane %v1075, 4
        %v1077 = vmax.f32 %v1075, %v1076
        %v1078 = vrot.slane %v1077, 2
        %v1079 = vmax.f32 %v1077, %v1078
        %v1080 = vrot.slane %v1079, 1
        %v1081 = vmax.f32 %v1079, %v1080
        %v1082 = vsel %vm850, %v665, -inf
        %v1083 = vrot.slane %v1082, 4
        %v1084 = vmax.f32 %v1082, %v1083
        %v1085 = vrot.slane %v1084, 2
        %v1086 = vmax.f32 %v1084, %v1085
        %v1087 = vrot.slane %v1086, 1
        %v1088 = vmax.f32 %v1086, %v1087
        %v1089 = vsel %vm850, %v664, -inf
        %v1090 = vrot.slane %v1089, 4
        %v1091 = vmax.f32 %v1089, %v1090
        %v1092 = vrot.slane %v1091, 2
        %v1093 = vmax.f32 %v1091, %v1092
        %v1094 = vrot.slane %v1093, 1
        %v1095 = vmax.f32 %v1093, %v1094
        %v1096 = vsel %vm850, %v666, -inf
        %v1097 = vrot.slane %v1096, 4
        %v1098 = vmax.f32 %v1096, %v1097
        %v1099 = vrot.slane %v1098, 2
        %v1100 = vmax.f32 %v1098, %v1099
        %v1101 = vrot.slane %v1100, 1
        %v1102 = vmax.f32 %v1100, %v1101
        %v1103 = vsel %vm850, %v674, -inf
        %v1104 = vrot.slane %v1103, 4
        %v1105 = vmax.f32 %v1103, %v1104
        %v1106 = vrot.slane %v1105, 2
        %v1107 = vmax.f32 %v1105, %v1106
        %v1108 = vrot.slane %v1107, 1
        %v1109 = vmax.f32 %v1107, %v1108
        %v1110 = vsel %vm850, %v682, -inf
        %v1111 = vrot.slane %v1110, 4
        %v1112 = vmax.f32 %v1110, %v1111
        %v1113 = vrot.slane %v1112, 2
        %v1114 = vmax.f32 %v1112, %v1113
        %v1115 = vrot.slane %v1114, 1
        %v1116 = vmax.f32 %v1114, %v1115
        %v1117 = vsel %vm850, %v681, -inf
        %v1118 = vrot.slane %v1117, 4
        %v1119 = vmax.f32 %v1117, %v1118
        %v1120 = vrot.slane %v1119, 2
        %v1121 = vmax.f32 %v1119, %v1120
        %v1122 = vrot.slane %v1121, 1
        %v1123 = vmax.f32 %v1121, %v1122
        %v1124 = vsel %vm850, %v683, -inf
        %v1125 = vrot.slane %v1124, 4
        %v1126 = vmax.f32 %v1124, %v1125
        %v1127 = vrot.slane %v1126, 2
        %v1128 = vmax.f32 %v1126, %v1127
        %v1129 = vrot.slane %v1128, 1
        %v1130 = vmax.f32 %v1128, %v1129
        %v1131 = vsel %vm850, %v691, -inf
        %v1132 = vrot.slane %v1131, 4
        %v1133 = vmax.f32 %v1131, %v1132
        %v1134 = vrot.slane %v1133, 2
        %v1135 = vmax.f32 %v1133, %v1134
        %v1136 = vrot.slane %v1135, 1
        %v1137 = vmax.f32 %v1135, %v1136
        %v1138 = vsel %vm850, %v699, -inf
        %v1139 = vrot.slane %v1138, 4
        %v1140 = vmax.f32 %v1138, %v1139
        %v1141 = vrot.slane %v1140, 2
        %v1142 = vmax.f32 %v1140, %v1141
        %v1143 = vrot.slane %v1142, 1
        %v1144 = vmax.f32 %v1142, %v1143
        %v1145 = vsel %vm850, %v698, -inf
        %v1146 = vrot.slane %v1145, 4
        %v1147 = vmax.f32 %v1145, %v1146
        %v1148 = vrot.slane %v1147, 2
        %v1149 = vmax.f32 %v1147, %v1148
        %v1150 = vrot.slane %v1149, 1
        %v1151 = vmax.f32 %v1149, %v1150
        %v1152 = vsel %vm850, %v700, -inf
        %v1153 = vrot.slane %v1152, 4
        %v1154 = vmax.f32 %v1152, %v1153
        %v1155 = vrot.slane %v1154, 2
        %v1156 = vmax.f32 %v1154, %v1155
        %v1157 = vrot.slane %v1156, 1
        %v1158 = vmax.f32 %v1156, %v1157
        %v1159 = vsel %vm850, %v708, -inf
        %v1160 = vrot.slane %v1159, 4
        %v1161 = vmax.f32 %v1159, %v1160
        %v1162 = vrot.slane %v1161, 2
        %v1163 = vmax.f32 %v1161, %v1162
        %v1164 = vrot.slane %v1163, 1
        %v1165 = vmax.f32 %v1163, %v1164
        %v1166 = vsel %vm850, %v716, -inf
        %v1167 = vrot.slane %v1166, 4
        %v1168 = vmax.f32 %v1166, %v1167
        %v1169 = vrot.slane %v1168, 2
        %v1170 = vmax.f32 %v1168, %v1169
        %v1171 = vrot.slane %v1170, 1
        %v1172 = vmax.f32 %v1170, %v1171
        %v1173 = vsel %vm850, %v715, -inf
        %v1174 = vrot.slane %v1173, 4
        %v1175 = vmax.f32 %v1173, %v1174
        %v1176 = vrot.slane %v1175, 2
        %v1177 = vmax.f32 %v1175, %v1176
        %v1178 = vrot.slane %v1177, 1
        %v1179 = vmax.f32 %v1177, %v1178
        %v1180 = vsel %vm850, %v717, -inf
        %v1181 = vrot.slane %v1180, 4
        %v1182 = vmax.f32 %v1180, %v1181
        %v1183 = vrot.slane %v1182, 2
        %v1184 = vmax.f32 %v1182, %v1183
        %v1185 = vrot.slane %v1184, 1
        %v1186 = vmax.f32 %v1184, %v1185
        %v1187 = vsel %vm850, %v725, -inf
        %v1188 = vrot.slane %v1187, 4
        %v1189 = vmax.f32 %v1187, %v1188
        %v1190 = vrot.slane %v1189, 2
        %v1191 = vmax.f32 %v1189, %v1190
        %v1192 = vrot.slane %v1191, 1
        %v1193 = vmax.f32 %v1191, %v1192
        %v1194 = vsel %vm850, %v733, -inf
        %v1195 = vrot.slane %v1194, 4
        %v1196 = vmax.f32 %v1194, %v1195
        %v1197 = vrot.slane %v1196, 2
        %v1198 = vmax.f32 %v1196, %v1197
        %v1199 = vrot.slane %v1198, 1
        %v1200 = vmax.f32 %v1198, %v1199
        %v1201 = vsel %vm850, %v732, -inf
        %v1202 = vrot.slane %v1201, 4
        %v1203 = vmax.f32 %v1201, %v1202
        %v1204 = vrot.slane %v1203, 2
        %v1205 = vmax.f32 %v1203, %v1204
        %v1206 = vrot.slane %v1205, 1
        %v1207 = vmax.f32 %v1205, %v1206
        %v1208 = vsel %vm850, %v734, -inf
        %v1209 = vrot.slane %v1208, 4
        %v1210 = vmax.f32 %v1208, %v1209
        %v1211 = vrot.slane %v1210, 2
        %v1212 = vmax.f32 %v1210, %v1211
        %v1213 = vrot.slane %v1212, 1
        %v1214 = vmax.f32 %v1212, %v1213
        %v1215 = vsel %vm850, %v742, -inf
        %v1216 = vrot.slane %v1215, 4
        %v1217 = vmax.f32 %v1215, %v1216
        %v1218 = vrot.slane %v1217, 2
        %v1219 = vmax.f32 %v1217, %v1218
        %v1220 = vrot.slane %v1219, 1
        %v1221 = vmax.f32 %v1219, %v1220
        %v1222 = vsel %vm850, %v750, -inf
        %v1223 = vrot.slane %v1222, 4
        %v1224 = vmax.f32 %v1222, %v1223
        %v1225 = vrot.slane %v1224, 2
        %v1226 = vmax.f32 %v1224, %v1225
        %v1227 = vrot.slane %v1226, 1
        %v1228 = vmax.f32 %v1226, %v1227
        %v1229 = vsel %vm850, %v749, -inf
        %v1230 = vrot.slane %v1229, 4
        %v1231 = vmax.f32 %v1229, %v1230
        %v1232 = vrot.slane %v1231, 2
        %v1233 = vmax.f32 %v1231, %v1232
        %v1234 = vrot.slane %v1233, 1
        %v1235 = vmax.f32 %v1233, %v1234
        %v1236 = vsel %vm850, %v751, -inf
        %v1237 = vrot.slane %v1236, 4
        %v1238 = vmax.f32 %v1236, %v1237
        %v1239 = vrot.slane %v1238, 2
        %v1240 = vmax.f32 %v1238, %v1239
        %v1241 = vrot.slane %v1240, 1
        %v1242 = vmax.f32 %v1240, %v1241
        %v1243 = vsel %vm850, %v759, -inf
        %v1244 = vrot.slane %v1243, 4
        %v1245 = vmax.f32 %v1243, %v1244
        %v1246 = vrot.slane %v1245, 2
        %v1247 = vmax.f32 %v1245, %v1246
        %v1248 = vrot.slane %v1247, 1
        %v1249 = vmax.f32 %v1247, %v1248
        %v1250 = vsel %vm850, %v767, -inf
        %v1251 = vrot.slane %v1250, 4
        %v1252 = vmax.f32 %v1250, %v1251
        %v1253 = vrot.slane %v1252, 2
        %v1254 = vmax.f32 %v1252, %v1253
        %v1255 = vrot.slane %v1254, 1
        %v1256 = vmax.f32 %v1254, %v1255
        %v1257 = vsel %vm850, %v766, -inf
        %v1258 = vrot.slane %v1257, 4
        %v1259 = vmax.f32 %v1257, %v1258
        %v1260 = vrot.slane %v1259, 2
        %v1261 = vmax.f32 %v1259, %v1260
        %v1262 = vrot.slane %v1261, 1
        %v1263 = vmax.f32 %v1261, %v1262
        %v1264 = vsel %vm850, %v768, -inf
        %v1265 = vrot.slane %v1264, 4
        %v1266 = vmax.f32 %v1264, %v1265
        %v1267 = vrot.slane %v1266, 2
        %v1268 = vmax.f32 %v1266, %v1267
        %v1269 = vrot.slane %v1268, 1
        %v1270 = vmax.f32 %v1268, %v1269
        %v1271 = vsel %vm850, %v776, -inf
        %v1272 = vrot.slane %v1271, 4
        %v1273 = vmax.f32 %v1271, %v1272
        %v1274 = vrot.slane %v1273, 2
        %v1275 = vmax.f32 %v1273, %v1274
        %v1276 = vrot.slane %v1275, 1
        %v1277 = vmax.f32 %v1275, %v1276
        %v1278 = vsel %vm850, %v784, -inf
        %v1279 = vrot.slane %v1278, 4
        %v1280 = vmax.f32 %v1278, %v1279
        %v1281 = vrot.slane %v1280, 2
        %v1282 = vmax.f32 %v1280, %v1281
        %v1283 = vrot.slane %v1282, 1
        %v1284 = vmax.f32 %v1282, %v1283
        %v1285 = vsel %vm850, %v783, -inf
        %v1286 = vrot.slane %v1285, 4
        %v1287 = vmax.f32 %v1285, %v1286
        %v1288 = vrot.slane %v1287, 2
        %v1289 = vmax.f32 %v1287, %v1288
        %v1290 = vrot.slane %v1289, 1
        %v1291 = vmax.f32 %v1289, %v1290
        %v1292 = vsel %vm850, %v785, -inf
        %v1293 = vrot.slane %v1292, 4
        %v1294 = vmax.f32 %v1292, %v1293
        %v1295 = vrot.slane %v1294, 2
        %v1296 = vmax.f32 %v1294, %v1295
        %v1297 = vrot.slane %v1296, 1
        %v1298 = vmax.f32 %v1296, %v1297
        %vm1363 = vcmask 1041409
        %v1364 = vsel %vm1363, %v864, %v857
        %vm1365 = vcmask 1042434
        %v1366 = vsel %vm1365, %v871, %v1364
        %vm1367 = vcmask 1043459
        %v1368 = vsel %vm1367, %v878, %v1366
        %vm1369 = vcmask 1044484
        %v1370 = vsel %vm1369, %v885, %v1368
        %vm1371 = vcmask 1045509
        %v1372 = vsel %vm1371, %v892, %v1370
        %vm1373 = vcmask 1046534
        %v1374 = vsel %vm1373, %v899, %v1372
        %vm1375 = vcmask 1047559
        %v1376 = vsel %vm1375, %v906, %v1374
        %v1377 = vsel %vm1363, %v920, %v913
        %v1378 = vsel %vm1365, %v927, %v1377
        %v1379 = vsel %vm1367, %v934, %v1378
        %v1380 = vsel %vm1369, %v941, %v1379
        %v1381 = vsel %vm1371, %v948, %v1380
        %v1382 = vsel %vm1373, %v955, %v1381
        %v1383 = vsel %vm1375, %v962, %v1382
        %v1384 = vsel %vm1363, %v976, %v969
        %v1385 = vsel %vm1365, %v983, %v1384
        %v1386 = vsel %vm1367, %v990, %v1385
        %v1387 = vsel %vm1369, %v997, %v1386
        %v1388 = vsel %vm1371, %v1004, %v1387
        %v1389 = vsel %vm1373, %v1011, %v1388
        %v1390 = vsel %vm1375, %v1018, %v1389
        %v1391 = vsel %vm1363, %v1032, %v1025
        %v1392 = vsel %vm1365, %v1039, %v1391
        %v1393 = vsel %vm1367, %v1046, %v1392
        %v1394 = vsel %vm1369, %v1053, %v1393
        %v1395 = vsel %vm1371, %v1060, %v1394
        %v1396 = vsel %vm1373, %v1067, %v1395
        %v1397 = vsel %vm1375, %v1074, %v1396
        %v1398 = vsel %vm1363, %v1088, %v1081
        %v1399 = vsel %vm1365, %v1095, %v1398
        %v1400 = vsel %vm1367, %v1102, %v1399
        %v1401 = vsel %vm1369, %v1109, %v1400
        %v1402 = vsel %vm1371, %v1116, %v1401
        %v1403 = vsel %vm1373, %v1123, %v1402
        %v1404 = vsel %vm1375, %v1130, %v1403
        %v1405 = vsel %vm1363, %v1144, %v1137
        %v1406 = vsel %vm1365, %v1151, %v1405
        %v1407 = vsel %vm1367, %v1158, %v1406
        %v1408 = vsel %vm1369, %v1165, %v1407
        %v1409 = vsel %vm1371, %v1172, %v1408
        %v1410 = vsel %vm1373, %v1179, %v1409
        %v1411 = vsel %vm1375, %v1186, %v1410
        %v1412 = vsel %vm1363, %v1200, %v1193
        %v1413 = vsel %vm1365, %v1207, %v1412
        %v1414 = vsel %vm1367, %v1214, %v1413
        %v1415 = vsel %vm1369, %v1221, %v1414
        %v1416 = vsel %vm1371, %v1228, %v1415
        %v1417 = vsel %vm1373, %v1235, %v1416
        %v1418 = vsel %vm1375, %v1242, %v1417
        %v1419 = vsel %vm1363, %v1256, %v1249
        %v1420 = vsel %vm1365, %v1263, %v1419
        %v1421 = vsel %vm1367, %v1270, %v1420
        %v1422 = vsel %vm1369, %v1277, %v1421
        %v1423 = vsel %vm1371, %v1284, %v1422
        %v1424 = vsel %vm1373, %v1291, %v1423
        %v1425 = vsel %vm1375, %v1298, %v1424
        %1434 = vxpose.xlu0.b32.start [1/16] %v1376, 128
        %1435 = vxpose.xlu0.b32.cont [2/16] %v1383, 128
        %1436 = vxpose.xlu0.b32.cont [3/16] %v1390, 128
        %1437 = vxpose.xlu0.b32.cont [4/16] %v1397, 128
        %1438 = vxpose.xlu0.b32.cont [5/16] %v1404, 128
        %1439 = vxpose.xlu0.b32.cont [6/16] %v1411, 128
        %1440 = vxpose.xlu0.b32.cont [7/16] %v1418, 128
        %1441 = vxpose.xlu0.b32.cont [8/16] %v1425, 128
        %1442 = vxpose.xlu0.b32.cont [9/16] 0.0, 128
        %1443 = vxpose.xlu0.b32.cont [10/16] 0.0, 128
        %1444 = vxpose.xlu0.b32.cont [11/16] 0.0, 128
        %1445 = vxpose.xlu0.b32.cont [12/16] 0.0, 128
        %1446 = vxpose.xlu0.b32.cont [13/16] 0.0, 128
        %1447 = vxpose.xlu0.b32.cont [14/16] 0.0, 128
        %1448 = vxpose.xlu0.b32.cont [15/16] 0.0, 128
        %1449 = vxpose.xlu0.b32.end [16/16] 0.0, 128
        %v1450 = vpop.trf.xlu0
        %v1451 = vpop.trf.xlu0
        %v1452 = vpop.trf.xlu0
        %v1453 = vpop.trf.xlu0
        %v1454 = vpop.trf.xlu0
        %v1455 = vpop.trf.xlu0
        %v1456 = vpop.trf.xlu0
        %v1457 = vpop.trf.xlu0
        %v1458 = vpop.trf.xlu0
        %v1459 = vpop.trf.xlu0
        %v1460 = vpop.trf.xlu0
        %v1461 = vpop.trf.xlu0
        %v1462 = vpop.trf.xlu0
        %v1463 = vpop.trf.xlu0
        %v1464 = vpop.trf.xlu0
        %v1465 = vpop.trf.xlu0
        %v1466 = vpack.c.bf16 %v1451, %v1450
        %v1467 = vpack.c.bf16 %v1453, %v1452
        %v1470 = vunpack.c.l.b16 %v1466
        %v1471 = vunpack.c.h.b16 %v1466
        %v1472 = vunpack.c.l.b16 %v1467
        %v1473 = vunpack.c.h.b16 %v1467
        %v1474 = vpack.c.b16 %v1470, %v1470
        %v1475 = vpack.c.b16 %v1471, %v1471
        %v1476 = vpack.c.b16 %v1472, %v1472
        %v1477 = vpack.c.b16 %v1473, %v1473
        %vm1482 = vcmask 519168
        %1483 = vst.msk [vmem:[%s203] sm:$0xf] %vm1482, %v1474
        %1484 = vst.msk [vmem:[%s203 + $0x4] sm:$0xf] %vm1482, %v1475
        %1485 = vst.msk [vmem:[%s203 + $0x8] sm:$0xf] %vm1482, %v1476
        %1486 = vst.msk [vmem:[%s203 + $0xc] sm:$0xf] %vm1482, %v1477
        %s1487 = sand.u32 %s97, 1
        %s1488 = scalar_lea.sflag [#allocation4], %s1487
        %s1489 = sand.u32 %s97, 1
        %s1490 = smul.addr %s1489, 16
        %s1491 = scalar_lea.vmem [#allocation7], %s1490
        // Predicated region
        $region41: #{tpu_custom_call.1} parent=31 // pred_check
          %p1492 = pneg %p107
        $region42: #{tpu_custom_call.1} parent=31 // pred_check_branch
          %1494 = sbr.rel (%p1492) target = $region44
        $region43: #{tpu_custom_call.1} parent=31 // pred_region
          %s1496 = ssub.s32 256, 256
          %1497 = vsyncadd %s1488, %s1496
          %s1498 = smul.addr %s21, 4
          %s1499 = smul.addr %s1498, 64
          %s1500 = scalar_lea.hbm %s3, %s1499
          %s1501 = sshll.u32 %s1491, 4
          %s1502 = int_to_ptr.vmem [resolvable:$true] %s1501
          %1507 = dma.vmem_to_hbm [thread:$0]  %s1502, 256, %s1500, %s1488, 64, 64, 4
        $region44: #{tpu_custom_call.1} parent=31 // pred_fallthru
          _
      $region32: #{tpu_custom_call.1} parent=5 // pred_fallthru
        _
      %p1508 = scmp.le.s32.totalorder 2, %s16
      // Predicated region
      $region45: #{tpu_custom_call.1} parent=5 // pred_check
        %p1509 = pneg %p1508
      $region46: #{tpu_custom_call.1} parent=5 // pred_check_branch
        %1511 = sbr.rel (%p1509) target = $region48
      $region47: #{tpu_custom_call.1} parent=5 // pred_region
        %s1512 = ssub.s32 %s16, 2
        // Predicated region
        $region49: #{tpu_custom_call.1} parent=47 // pred_check
          %p1513 = pneg %p113
        $region50: #{tpu_custom_call.1} parent=47 // pred_check_branch
          %1515 = sbr.rel (%p1513) target = $region52
        $region51: #{tpu_custom_call.1} parent=47 // pred_region
          %s1516 = sand.u32 %s98, 1
          %s1517 = scalar_lea.sflag [#allocation4], %s1516
          %s1518 = sand.u32 %s98, 1
          %s1519 = smul.addr %s1518, 16
          %s1520 = scalar_lea.vmem [#allocation7], %s1519
          %1521 = dma.done %s1517, 256
        $region52: #{tpu_custom_call.1} parent=47 // pred_fallthru
          _
      $region48: #{tpu_custom_call.1} parent=5 // pred_fallthru
        _
    $region6: #{tpu_custom_call.1} parent=1 // loop_footer
      %s20 = sadd.s32 1, %s16
    $region7: #{tpu_custom_call.1} parent=1 // loop_footer_branch
      %15 = sbr.rel target = $region3
    $region8: #{tpu_custom_call.1} parent=1 // loop_exit
      _
    %1522 = vsyncpa [#allocation3], 1
    %s1523 = scalar_lea.sflag [#allocation3], 1
    %1524 = vsyncpa %s1523, 1
    %1525 = vsyncpa [#allocation6], 1
    %1526 = vsyncpa [#allocation4], 1
    %s1527 = scalar_lea.sflag [#allocation4], 1
    %1528 = vsyncpa %s1527, 1

</llo_original>
